<compile_context>
chip_gen: v5e
topology: v5e:2x2
jax: 0.10.0
libtpu: 0.0.40
codegen_flags: <defaults>
</compile_context>

<pallas_src>
import functools

import jax
import jax.numpy as jnp
from jax.experimental import pallas as pl
from jax.experimental.pallas import tpu as pltpu


def _cdiv(a, b):
    return -(-a // b)


def _num_tensorcores():
    """2 on multi-TensorCore chips (v7x / megacore v4/v5p), else 1 (v5e/v6e)."""
    try:
        kind = jax.devices()[0].device_kind.lower()
    except Exception:
        return 1
    if "v7" in kind or "v4" in kind or "v5p" in kind:
        # NOTE: uses "parallel" dimension semantics for the core split; switch
        # to pltpu.CORE_PARALLEL if profiling shows the split is not sharded.
        return 2
    return 1


def _vmem_limit_bytes():
    """Scoped-VMEM limit: ~3/4 of physical capacity, clamped to [32, 64] MiB."""
    cap = 64 * 1024 * 1024
    try:
        cap = int(pltpu.get_tpu_info().vmem_capacity_bytes)
    except Exception:
        pass
    return max(32 * 1024 * 1024, min(64 * 1024 * 1024, (cap * 3) // 4))


# --------------------------------------------------------------------------
# K == 1 path: sublane+lane folded (rows, 128) layout.
# --------------------------------------------------------------------------
def _k1_kernel(out_ref, pk_ref, acc_ref, *, total_rows, tile_rows, tiles_per_core):
    p = pl.program_id(0)
    t = pl.program_id(1)

    @pl.when(t == 0)
    def _init():
        acc_ref[...] = jnp.zeros_like(acc_ref)

    eps = jnp.float32(1e-10)
    out = out_ref[...].astype(jnp.float32)      # (tile_rows, 128) full vregs
    t0 = pk_ref[0].astype(jnp.float32)          # (tile_rows, 128)
    t1 = pk_ref[1].astype(jnp.float32)
    w = pk_ref[2].astype(jnp.float32)

    # Logs hit the EUP; everything else is VPU.  No cross-lane work per step.
    wll = w * (t0 * jnp.log(1.0 - out + eps) + t1 * jnp.log(out + eps))

    # Mask rows coming from ragged / out-of-range boundary blocks.  Rows below
    # total_rows are either real data or the neutral (zero-weight) lane pad.
    row0 = (p * tiles_per_core + t) * tile_rows
    rows = row0 + jax.lax.broadcasted_iota(jnp.int32, (tile_rows, 128), 0)
    wll = jnp.where(rows < total_rows, wll, 0.0)

    # Fold the tile into the small (8, 128) accumulator with plain VPU adds.
    acc_ref[...] += jnp.sum(jnp.reshape(wll, (tile_rows // 8, 8, 128)), axis=0)


def _censored_loss_k1(out_flat, packed, *, scale, nc, vmem_limit, tile_rows=None):
    (n_total,) = out_flat.shape
    rows = _cdiv(n_total, 128)
    total_rows = _cdiv(rows, 8) * 8                 # whole (8,128) tiles
    pad = total_rows * 128 - n_total
    if pad:
        # Neutral tail (only when N is not already a multiple of 1024):
        # out -> 0.5 (finite logs), t0/t1/w -> 0 (zero contribution).
        out_flat = jnp.pad(out_flat, (0, pad), constant_values=0.5)
        packed = jnp.pad(packed, ((0, 0), (0, pad)))
    out2 = jnp.reshape(out_flat, (total_rows, 128))
    pk3 = jnp.reshape(packed, (3, total_rows, 128))

    o_item = jnp.dtype(out2.dtype).itemsize
    p_item = jnp.dtype(pk3.dtype).itemsize
    if tile_rows is None:
        # Double-buffered bytes per row of 128 lanes; spend roughly half the
        # scoped-VMEM budget on the streaming tiles.
        per_row = 2 * 128 * (o_item + 3 * p_item)
        tile_rows = (vmem_limit // 2 // per_row) // 8 * 8
        tile_rows = max(8, min(4096, tile_rows))
    tile_rows = int(min(tile_rows, total_rows))
    assert tile_rows % 8 == 0, "tile_rows must be a multiple of 8 sublanes"

    num_tiles = _cdiv(total_rows, tile_rows)
    nc = int(max(1, min(nc, num_tiles)))
    tpc = _cdiv(num_tiles, nc)
    last_tile = num_tiles - 1                       # clamp fully-OOB tiles

    kernel = functools.partial(_k1_kernel, total_rows=total_rows,
                               tile_rows=tile_rows, tiles_per_core=tpc)

    partials = pl.pallas_call(
        kernel,
        out_shape=jax.ShapeDtypeStruct((nc, 8, 128), jnp.float32),
        grid=(nc, tpc),
        in_specs=[
            pl.BlockSpec((tile_rows, 128),
                         lambda p, t: (jnp.minimum(p * tpc + t, last_tile), 0)),
            pl.BlockSpec((3, tile_rows, 128),
                         lambda p, t: (0, jnp.minimum(p * tpc + t, last_tile), 0)),
        ],
        out_specs=pl.BlockSpec((None, 8, 128), lambda p, t: (p, 0, 0)),
        compiler_params=pltpu.CompilerParams(
            dimension_semantics=("parallel", "arbitrary"),
            vmem_limit_bytes=int(vmem_limit),
        ),
        cost_estimate=pl.CostEstimate(
            flops=int(8 * total_rows * 128),
            transcendentals=int(2 * total_rows * 128),
            bytes_accessed=int(out2.size * o_item + pk3.size * p_item
                               + nc * 8 * 128 * 4),
        ),
    )(out2, pk3)

    # Single small cross-lane reduce + negate + scale, once, outside the loop.
    return jnp.reshape(-jnp.float32(scale) * jnp.sum(partials), (1,))


# --------------------------------------------------------------------------
# K >= 2 path: native (N, K) layout, reduce over N on the MXU.
# --------------------------------------------------------------------------
def _kn_kernel(out_ref, pk_ref, acc_ref, *, n_valid, tile_n, tiles_per_core):
    p = pl.program_id(0)
    t = pl.program_id(1)

    @pl.when(t == 0)
    def _init():
        acc_ref[...] = jnp.zeros_like(acc_ref)

    eps = jnp.float32(1e-10)
    out = out_ref[...].astype(jnp.float32)          # (tile_n, K) native layout
    pk = pk_ref[...].astype(jnp.float32)            # (3, tile_n)

    n0 = (p * tiles_per_core + t) * tile_n
    valid_row = (n0 + jax.lax.broadcasted_iota(jnp.int32, (1, tile_n), 1)) < n_valid
    valid_col = (n0 + jax.lax.broadcasted_iota(jnp.int32, (tile_n, 1), 0)) < n_valid

    # Zero the per-sample coefficients and neutralize garbage rows of `out`
    # from ragged boundary blocks before the logs (avoids 0 * NaN in the dot).
    c0 = jnp.where(valid_row, pk[2:3, :] * pk[0:1, :], 0.0)    # (1, tile_n)
    c1 = jnp.where(valid_row, pk[2:3, :] * pk[1:2, :], 0.0)
    out = jnp.where(valid_col, out, 0.5)

    l0 = jnp.log(1.0 - out + eps)                   # (tile_n, K)
    l1 = jnp.log(out + eps)

    # Reduce over N on the otherwise-idle MXU: (1, tile_n) @ (tile_n, K).
    acc_ref[...] += (jnp.dot(c0, l0, preferred_element_type=jnp.float32)
                     + jnp.dot(c1, l1, preferred_element_type=jnp.float32))


def _censored_loss_kn(out2d, packed, *, scale, nc, vmem_limit, tile_n=None):
    n_total, k = out2d.shape
    o_item = jnp.dtype(out2d.dtype).itemsize
    p_item = jnp.dtype(packed.dtype).itemsize
    if tile_n is None:
        lanes_k = _cdiv(k, 128) * 128               # VMEM lane padding of out tile
        per_n = 2 * (lanes_k * o_item + 8 * p_item)  # double-buffered bytes/sample
        tile_n = (vmem_limit // 2 // per_n) // 128 * 128
        tile_n = max(128, min(8192, tile_n))
    if n_total <= tile_n:
        tile_n = n_total                            # single full block
    tile_n = int(tile_n)
    if tile_n < n_total:
        assert tile_n % 128 == 0, "tile_n must be a multiple of 128"

    num_tiles = _cdiv(n_total, tile_n)
    nc = int(max(1, min(nc, num_tiles)))
    tpc = _cdiv(num_tiles, nc)
    last_tile = num_tiles - 1

    kernel = functools.partial(_kn_kernel, n_valid=n_total, tile_n=tile_n,
                               tiles_per_core=tpc)

    partials = pl.pallas_call(
        kernel,
        out_shape=jax.ShapeDtypeStruct((nc, 1, k), jnp.float32),
        grid=(nc, tpc),
        in_specs=[
            pl.BlockSpec((tile_n, k),
                         lambda p, t: (jnp.minimum(p * tpc + t, last_tile), 0)),
            pl.BlockSpec((3, tile_n),
                         lambda p, t: (0, jnp.minimum(p * tpc + t, last_tile))),
        ],
        out_specs=pl.BlockSpec((None, 1, k), lambda p, t: (p, 0, 0)),
        compiler_params=pltpu.CompilerParams(
            dimension_semantics=("parallel", "arbitrary"),
            vmem_limit_bytes=int(vmem_limit),
        ),
        cost_estimate=pl.CostEstimate(
            flops=int(9 * n_total * k),
            transcendentals=int(2 * n_total * k),
            bytes_accessed=int(out2d.size * o_item + packed.size * p_item
                               + nc * k * 4),
        ),
    )(out2d, packed)

    return -jnp.float32(scale) * jnp.sum(partials, axis=(0, 1))


# --------------------------------------------------------------------------
# Public wrapper (matches CensoredLoss_Sub.forward(outputs, (targets, weights)))
# --------------------------------------------------------------------------
def censored_loss_sub(outputs, targets, weights, reduction="mean", *,
                      num_cores=None, tile_rows=None, tile_n=None):
    """Returns the length-K loss vector, matching the PyTorch module."""
    # TODO(synk): PyTorch returns torch.tensor(1) when B*T == 0; assumes N > 0.
    B, T, _v = targets.shape
    N = B * T
    out2d = jnp.reshape(outputs, (N, -1))
    K = out2d.shape[1]

    if reduction == "sum":
        scale = 1.0
    elif reduction == "mean":
        scale = 1.0 / float(N)                      # total_count == B * T
    else:
        raise ValueError("Unsupported reduction type. Choose 'mean' or 'sum'.")

    # One packed (3, N) operand (t0, t1, w): the channel slices are a copy
    # anyway, and packing means one extra row-DMA per grid step instead of 3.
    pk_dtype = jnp.result_type(targets.dtype, weights.dtype)
    packed = jnp.stack([
        jnp.reshape(targets[:, :, 0], (N,)),
        jnp.reshape(targets[:, :, 1], (N,)),
        jnp.reshape(weights, (N,)),
    ]).astype(pk_dtype)

    nc = _num_tensorcores() if num_cores is None else int(num_cores)
    vmem_limit = _vmem_limit_bytes()

    if K == 1:
        return _censored_loss_k1(jnp.reshape(out2d, (N,)), packed, scale=scale,
                                 nc=nc, vmem_limit=vmem_limit,
                                 tile_rows=tile_rows)
    return _censored_loss_kn(out2d, packed, scale=scale, nc=nc,
                             vmem_limit=vmem_limit, tile_n=tile_n)


def _reference(outputs, targets, weights, reduction="mean"):
    """Pure-JAX reference mirroring the PyTorch double loop."""
    B, T, _ = targets.shape
    out = jnp.reshape(outputs, (B, T, -1)).astype(jnp.float32)
    eps = 1e-10
    t0 = targets[:, :, 0:1].astype(jnp.float32)
    t1 = targets[:, :, 1:2].astype(jnp.float32)
    w = weights[:, :, None].astype(jnp.float32)
    total = (t0 * jnp.log(1.0 - out + eps) + t1 * jnp.log(out + eps)) * w
    loss = jnp.sum(total, axis=(0, 1))
    if reduction == "sum":
        return -loss
    return -loss / (B * T)


if __name__ == "__main__":
    key = jax.random.PRNGKey(0)

    def make_case(k, B, T, K):
        k1, k2, k3 = jax.random.split(k, 3)
        outputs = jax.nn.sigmoid(jax.random.normal(k1, (B, T, K), dtype=jnp.float32))
        event = jax.random.bernoulli(k2, p=0.5, shape=(B, T)).astype(jnp.float32)
        targets = jnp.stack([1.0 - event, event], axis=-1)           # (B, T, 2)
        weights = jax.random.uniform(k3, (B, T), dtype=jnp.float32,
                                     minval=0.5, maxval=1.5)
        return outputs, targets, weights

    keys = jax.random.split(key, 3)

    # K == 1: multi-tile reduction (forced small tiles), misaligned N (pad path).
    o, t, w = make_case(keys[0], 4, 500, 1)                  # N = 2000
    got = jax.block_until_ready(
        censored_loss_sub(o, t, w, reduction="mean", num_cores=1, tile_rows=8))
    ref = _reference(o, t, w, reduction="mean")
    assert jnp.allclose(got, ref, rtol=1e-5, atol=1e-5), (got, ref)

    # Same data: explicit 2-way core split + 'sum' reduction.
    got = jax.block_until_ready(
        censored_loss_sub(o, t, w, reduction="sum", num_cores=2, tile_rows=8))
    ref = _reference(o, t, w, reduction="sum")
    assert jnp.allclose(got, ref, rtol=1e-5, atol=1e-5), (got, ref)

    # Same data with fully automatic tiling / core selection.
    got = jax.block_until_ready(censored_loss_sub(o, t, w, reduction="mean"))
    ref = _reference(o, t, w, reduction="mean")
    assert jnp.allclose(got, ref, rtol=1e-5, atol=1e-5), (got, ref)

    # K > 1: native (N, K) MXU path, small single-block case.
    o, t, w = make_case(keys[1], 2, 8, 3)                    # N = 16, K = 3
    got = jax.block_until_ready(censored_loss_sub(o, t, w, reduction="sum"))
    ref = _reference(o, t, w, reduction="sum")
    assert jnp.allclose(got, ref, rtol=1e-5, atol=1e-5), (got, ref)

    # K > 1: ragged N, forced multi-tile + 2-core split (exercises masking and
    # fully-out-of-range clamped tiles).
    o, t, w = make_case(keys[2], 3, 345, 3)                  # N = 1035, K = 3
    got = jax.block_until_ready(
        censored_loss_sub(o, t, w, reduction="mean", num_cores=2, tile_n=256))
    ref = _reference(o, t, w, reduction="mean")
    assert jnp.allclose(got, ref, rtol=1e-5, atol=1e-5), (got, ref)

    print("KERNEL_OK")
</pallas_src>

<mosaic_0001>
module attributes {stable_mosaic.version = 11 : i64} {
  func.func @_k1_kernel(%arg0: i32, %arg1: i32, %arg2: memref<8x128xf32, #tpu.memory_space<vmem>>, %arg3: memref<3x8x128xf32, #tpu.memory_space<vmem>>, %arg4: memref<1x8x128xf32, #tpu.memory_space<vmem>>) attributes {dimension_semantics = [#tpu.dimension_semantics<parallel>, #tpu.dimension_semantics<arbitrary>], iteration_bounds = array<i64: 1, 2>, scalar_prefetch = 0 : i64, scratch_operands = 0 : i64, tpu.core_type = #tpu.core_type<tc>, window_params = [{transform_indices = @transform_0, window_bounds = array<i64: 8, 128>}, {transform_indices = @transform_1, window_bounds = array<i64: 3, 8, 128>}, {transform_indices = @transform_2, window_bounds = array<i64: 1, 8, 128>}]} {
    %c0_i32 = arith.constant 0 : i32
    %0 = arith.cmpi eq, %arg1, %c0_i32 : i32
    %1 = arith.extui %0 : i1 to i32
    %c0_i32_0 = arith.constant 0 : i32
    %2 = arith.cmpi ne, %1, %c0_i32_0 : i32
    scf.if %2 {
      %cst_19 = arith.constant 0.000000e+00 : f32
      %40 = vector.broadcast %cst_19 : f32 to vector<8x128xf32>
      %c0_20 = arith.constant 0 : index
      %c0_21 = arith.constant 0 : index
      %c0_22 = arith.constant 0 : index
      %41 = vector.load %arg4[%c0_20, %c0_21, %c0_22] : memref<1x8x128xf32, #tpu.memory_space<vmem>>, vector<1x8x128xf32>
      %42 = vector.shape_cast %41 : vector<1x8x128xf32> to vector<8x128xf32>
      %43 = vector.shape_cast %40 : vector<8x128xf32> to vector<1x8x128xf32>
      tpu.vector_store %arg4[%c0_20, %c0_21, %c0_22], %43 {strides = array<i32>} : memref<1x8x128xf32, #tpu.memory_space<vmem>>, vector<1x8x128xf32>,
    } else {
    }
    %c0 = arith.constant 0 : index
    %c0_1 = arith.constant 0 : index
    %3 = vector.load %arg2[%c0, %c0_1] : memref<8x128xf32, #tpu.memory_space<vmem>>, vector<8x128xf32>
    %c0_2 = arith.constant 0 : index
    %c0_3 = arith.constant 0 : index
    %c0_4 = arith.constant 0 : index
    %4 = vector.load %arg3[%c0_2, %c0_3, %c0_4] : memref<3x8x128xf32, #tpu.memory_space<vmem>>, vector<1x8x128xf32>
    %5 = vector.shape_cast %4 : vector<1x8x128xf32> to vector<8x128xf32>
    %c1 = arith.constant 1 : index
    %c0_5 = arith.constant 0 : index
    %c0_6 = arith.constant 0 : index
    %6 = vector.load %arg3[%c1, %c0_5, %c0_6] : memref<3x8x128xf32, #tpu.memory_space<vmem>>, vector<1x8x128xf32>
    %7 = vector.shape_cast %6 : vector<1x8x128xf32> to vector<8x128xf32>
    %c2 = arith.constant 2 : index
    %c0_7 = arith.constant 0 : index
    %c0_8 = arith.constant 0 : index
    %8 = vector.load %arg3[%c2, %c0_7, %c0_8] : memref<3x8x128xf32, #tpu.memory_space<vmem>>, vector<1x8x128xf32>
    %9 = vector.shape_cast %8 : vector<1x8x128xf32> to vector<8x128xf32>
    %cst = arith.constant 1.000000e+00 : f32
    %10 = vector.broadcast %cst : f32 to vector<8x128xf32>
    %11 = arith.subf %10, %3 : vector<8x128xf32>
    %cst_9 = arith.constant 1.000000e-10 : f32
    %12 = vector.broadcast %cst_9 : f32 to vector<8x128xf32>
    %13 = arith.addf %11, %12 : vector<8x128xf32>
    %14 = math.log %13 : vector<8x128xf32>
    %15 = arith.mulf %5, %14 : vector<8x128xf32>
    %cst_10 = arith.constant 1.000000e-10 : f32
    %16 = vector.broadcast %cst_10 : f32 to vector<8x128xf32>
    %17 = arith.addf %3, %16 : vector<8x128xf32>
    %18 = math.log %17 : vector<8x128xf32>
    %19 = arith.mulf %7, %18 : vector<8x128xf32>
    %20 = arith.addf %15, %19 : vector<8x128xf32>
    %21 = arith.mulf %9, %20 : vector<8x128xf32>
    %c2_i32 = arith.constant 2 : i32
    %22 = arith.muli %arg0, %c2_i32 : i32
    %23 = arith.addi %22, %arg1 : i32
    %c8_i32 = arith.constant 8 : i32
    %24 = arith.muli %23, %c8_i32 : i32
    %25 = tpu.iota {dimensions = array<i32: 0>} : vector<8x128xi32>
    %26 = vector.broadcast %24 : i32 to vector<8x128xi32>
    %27 = arith.addi %26, %25 : vector<8x128xi32>
    %c16_i32 = arith.constant 16 : i32
    %28 = vector.broadcast %c16_i32 : i32 to vector<8x128xi32>
    %29 = arith.cmpi slt, %27, %28 : vector<8x128xi32>
    %cst_11 = arith.constant 0.000000e+00 : f32
    %30 = vector.broadcast %cst_11 : f32 to vector<8x128xf32>
    %31 = arith.select %29, %21, %30 : vector<8x128xi1>, vector<8x128xf32>
    %c0_12 = arith.constant 0 : index
    %c0_13 = arith.constant 0 : index
    %c0_14 = arith.constant 0 : index
    %32 = vector.load %arg4[%c0_12, %c0_13, %c0_14] : memref<1x8x128xf32, #tpu.memory_space<vmem>>, vector<1x8x128xf32>
    %33 = vector.shape_cast %32 : vector<1x8x128xf32> to vector<8x128xf32>
    %34 = vector.shape_cast %31 : vector<8x128xf32> to vector<1x8x128xf32>
    %cst_15 = arith.constant dense<0.000000e+00> : vector<8x128xf32>
    %35 = vector.multi_reduction <add>, %34, %cst_15 [0] : vector<1x8x128xf32> to vector<8x128xf32>
    %36 = arith.addf %33, %35 : vector<8x128xf32>
    %c0_16 = arith.constant 0 : index
    %c0_17 = arith.constant 0 : index
    %c0_18 = arith.constant 0 : index
    %37 = vector.load %arg4[%c0_16, %c0_17, %c0_18] : memref<1x8x128xf32, #tpu.memory_space<vmem>>, vector<1x8x128xf32>
    %38 = vector.shape_cast %37 : vector<1x8x128xf32> to vector<8x128xf32>
    %39 = vector.shape_cast %36 : vector<8x128xf32> to vector<1x8x128xf32>
    tpu.vector_store %arg4[%c0_16, %c0_17, %c0_18], %39 {strides = array<i32>} : memref<1x8x128xf32, #tpu.memory_space<vmem>>, vector<1x8x128xf32>,
    return
  }
  func.func @transform_0(%arg0: i32, %arg1: i32) -> (i32, i32) {
    %c2_i32 = arith.constant 2 : i32
    %0 = arith.muli %arg0, %c2_i32 : i32
    %1 = arith.addi %0, %arg1 : i32
    %c1_i32 = arith.constant 1 : i32
    %2 = arith.minsi %1, %c1_i32 : i32
    %c0_i32 = arith.constant 0 : i32
    %c0_i32_0 = arith.constant 0 : i32
    return %2, %c0_i32 : i32, i32
  }
  func.func @transform_1(%arg0: i32, %arg1: i32) -> (i32, i32, i32) {
    %c2_i32 = arith.constant 2 : i32
    %0 = arith.muli %arg0, %c2_i32 : i32
    %1 = arith.addi %0, %arg1 : i32
    %c1_i32 = arith.constant 1 : i32
    %2 = arith.minsi %1, %c1_i32 : i32
    %c0_i32 = arith.constant 0 : i32
    %c0_i32_0 = arith.constant 0 : i32
    %c0_i32_1 = arith.constant 0 : i32
    return %c0_i32, %2, %c0_i32_0 : i32, i32, i32
  }
  func.func @transform_2(%arg0: i32, %arg1: i32) -> (i32, i32, i32) {
    %c0_i32 = arith.constant 0 : i32
    %c0_i32_0 = arith.constant 0 : i32
    %c0_i32_1 = arith.constant 0 : i32
    return %arg0, %c0_i32, %c0_i32_0 : i32, i32, i32
  }
}

</mosaic_0001>

<llo_original>
// kernel: tpu_custom_call.1
$region0: #{tpu_custom_call.1}
  #allocation0 [shape = 'u32[]', space=smem, size = 0x4, offset = 0x4, fixed_abs, tag = 'smem constant byte address 0x4 - core index']
  #allocation1 [shape = 'u32[72,128]{1,0:T(1,128)}', space=vmem, size = 0x9000, scoped, tag = 'internal scratch']
  %s0 = inlined_call_operand.hbm [shape: f32[16,128], index: 0, kind: input, shape index: {}]
  %s1 = inlined_call_operand.hbm [shape: f32[3,16,128], index: 1, kind: input, shape index: {}]
  %s2 = inlined_call_operand.hbm [shape: f32[1,8,128], index: 2, kind: output, shape index: {}]
  %s3 = sld [smem:[#allocation0]]
  $region53: #{tpu_custom_call.1} parent=0
    _
  %s5 = ssub.s32 1, %s3
  %s6 = scalar_select 0, %s5, %s3
  $region1: #{tpu_custom_call.1} parent=0
    #allocation2 [shape = 'u8[8192]{0}', space=vmem, size = 0x2000, scoped, tag = 'input window, operand 0']
    #allocation3 [shape = 's32[2]{0}', space=sflag, size = 0x8, scoped, tag = 'scoped memory for tpu_custom_call.1']
    #allocation4 [shape = 's32[2]{0}', space=sflag, size = 0x8, scoped, tag = 'scoped memory for tpu_custom_call.1']
    #allocation5 [shape = 'u8[24576]{0}', space=vmem, size = 0x6000, scoped, tag = 'input window, operand 1']
    #allocation6 [shape = 's32[2]{0}', space=sflag, size = 0x8, scoped, tag = 'scoped memory for tpu_custom_call.1']
    #allocation7 [shape = 'u8[4096]{0}', space=vmem, size = 0x1000, scoped, tag = 'output window, operand 0, single buffered']
    %7 = vsyncpa [#allocation3], 0
    %s8 = scalar_lea.sflag [#allocation3], 1
    %9 = vsyncpa %s8, 0
    %10 = vsyncpa [#allocation6], 0
    %s11 = scalar_lea.sflag [#allocation6], 1
    %12 = vsyncpa %s11, 0
    %13 = vsyncpa [#allocation4], 0
    loop: start=0, step=1, limit=4
    $region2: #{tpu_custom_call.1} parent=1 // loop_pre_header
      _
    $region3: #{tpu_custom_call.1} parent=1 // loop_header
      %s15 = sphi 0, %s19
      %p16 = scmp.ge.s32.totalorder %s15, 4
      %s22 = sphi 0, %s34
      %s23 = sphi 0, %s30
      %s24 = sphi 0, %s22
      %s25 = sphi 0, %s23
      %s26 = sphi 0, %s24
      %s27 = sphi 0, %s25
      %s45 = sphi 0, %s47
      %s48 = sphi 0, %s45
      %s49 = sphi 0, %s48
      %s65 = sphi 0, %s49
      %s79 = sphi 0, %s81
      %s82 = sphi 0, %s79
      %s83 = sphi 0, %s82
      %s99 = sphi 0, %s83
      %s105 = sphi 0, %s107
      %s108 = sphi 0, %s105
      %s109 = sphi 0, %s108
      %s125 = sphi 0, %s109
    $region4: #{tpu_custom_call.1} parent=1 // loop_header_branch
      %18 = sbr.rel (%p16) target = $region8
    $region5: #{tpu_custom_call.1} parent=1 // loop_body
      %s20 = ssub.s32 %s15, 1
      %s21 = ssub.s32 %s15, 2
      %s28 = sadd.s32 1, %s23
      %p29 = scmp.ge.s32.totalorder %s28, 2
      %s30 = scalar_select %p29, 0, %s28
      %s31 = sadd.s32 1, %s22
      %s32 = scalar_select %p29, %s31, %s22
      %p33 = scmp.ge.s32.totalorder %s32, 1
      %s34 = scalar_select %p33, 0, %s32
      %s35 = smul.u32 %s22, 2
      %s36 = sadd.s32 %s35, %s23
      %p37 = scmp.lt.s32.totalorder %s36, 1
      %s38 = scalar_select %p37, %s36, 1
      %s39 = smul.u32 %s34, 2
      %s40 = sadd.s32 %s39, %s30
      %p41 = scmp.lt.s32.totalorder %s40, 1
      %s42 = scalar_select %p41, %s40, 1
      %s43 = ssub.s32 %s38, %s42
      %p44 = scmp.eq.s32.totalorder %s43, 0
      %s46 = sadd.s32 %s45, 1
      %s47 = scalar_select %p44, %s45, %s46
      %p50 = pneg %p44
      %p51 = scmp.eq.s32.totalorder %s15, 1
      %p52 = por %p50, %p51
      %p53 = scmp.ne.s32.totalorder %s45, %s48
      %p54 = scmp.eq.s32.totalorder %s15, 0
      %p55 = por %p53, %p54
      %p56 = scmp.ne.s32.totalorder %s45, %s48
      %p57 = scmp.eq.s32.totalorder %s20, 1
      %p58 = por %p56, %p57
      %p59 = scmp.ne.s32.totalorder %s48, %s49
      %p60 = scmp.eq.s32.totalorder %s20, 0
      %p61 = por %p59, %p60
      %p62 = scmp.ne.s32.totalorder %s48, %s49
      %p63 = scmp.eq.s32.totalorder %s21, 1
      %p64 = por %p62, %p63
      %p66 = scmp.ne.s32.totalorder %s49, %s65
      %p67 = scmp.eq.s32.totalorder %s21, 0
      %p68 = por %p66, %p67
      %s69 = smul.u32 %s22, 2
      %s70 = sadd.s32 %s69, %s23
      %p71 = scmp.lt.s32.totalorder %s70, 1
      %s72 = scalar_select %p71, %s70, 1
      %s73 = smul.u32 %s34, 2
      %s74 = sadd.s32 %s73, %s30
      %p75 = scmp.lt.s32.totalorder %s74, 1
      %s76 = scalar_select %p75, %s74, 1
      %s77 = ssub.s32 %s72, %s76
      %p78 = scmp.eq.s32.totalorder %s77, 0
      %s80 = sadd.s32 %s79, 1
      %s81 = scalar_select %p78, %s79, %s80
      %p84 = pneg %p78
      %p85 = scmp.eq.s32.totalorder %s15, 1
      %p86 = por %p84, %p85
      %p87 = scmp.ne.s32.totalorder %s79, %s82
      %p88 = scmp.eq.s32.totalorder %s15, 0
      %p89 = por %p87, %p88
      %p90 = scmp.ne.s32.totalorder %s79, %s82
      %p91 = scmp.eq.s32.totalorder %s20, 1
      %p92 = por %p90, %p91
      %p93 = scmp.ne.s32.totalorder %s82, %s83
      %p94 = scmp.eq.s32.totalorder %s20, 0
      %p95 = por %p93, %p94
      %p96 = scmp.ne.s32.totalorder %s82, %s83
      %p97 = scmp.eq.s32.totalorder %s21, 1
      %p98 = por %p96, %p97
      %p100 = scmp.ne.s32.totalorder %s83, %s99
      %p101 = scmp.eq.s32.totalorder %s21, 0
      %p102 = por %p100, %p101
      %s103 = ssub.s32 %s22, %s34
      %p104 = scmp.eq.s32.totalorder %s103, 0
      %s106 = sadd.s32 %s105, 1
      %s107 = scalar_select %p104, %s105, %s106
      %p110 = pneg %p104
      %p111 = scmp.eq.s32.totalorder %s15, 1
      %p112 = por %p110, %p111
      %p113 = scmp.ne.s32.totalorder %s105, %s108
      %p114 = scmp.eq.s32.totalorder %s15, 0
      %p115 = por %p113, %p114
      %p116 = scmp.ne.s32.totalorder %s105, %s108
      %p117 = scmp.eq.s32.totalorder %s20, 1
      %p118 = por %p116, %p117
      %p119 = scmp.ne.s32.totalorder %s108, %s109
      %p120 = scmp.eq.s32.totalorder %s20, 0
      %p121 = por %p119, %p120
      %p122 = scmp.ne.s32.totalorder %s108, %s109
      %p123 = scmp.eq.s32.totalorder %s21, 1
      %p124 = por %p122, %p123
      %p126 = scmp.ne.s32.totalorder %s109, %s125
      %p127 = scmp.eq.s32.totalorder %s21, 0
      %p128 = por %p126, %p127
      %p129 = scmp.le.s32.totalorder 1, %s15
      %p130 = scmp.lt.s32.totalorder %s15, 3
      %p131 = pnand %p129, %p130
      %p132 = pneg %p131
      // Predicated region
      $region9: #{tpu_custom_call.1} parent=5 // pred_check
        _
      $region10: #{tpu_custom_call.1} parent=5 // pred_check_branch
        %134 = sbr.rel (%p131) target = $region12
      $region11: #{tpu_custom_call.1} parent=5 // pred_region
        %s135 = ssub.s32 %s15, 1
      $region12: #{tpu_custom_call.1} parent=5 // pred_fallthru
        _
      %p136 = scmp.lt.s32.totalorder %s15, 2
      // Predicated region
      $region13: #{tpu_custom_call.1} parent=5 // pred_check
        %p137 = pneg %p136
      $region14: #{tpu_custom_call.1} parent=5 // pred_check_branch
        %139 = sbr.rel (%p137) target = $region16
      $region15: #{tpu_custom_call.1} parent=5 // pred_region
        // Predicated region
        $region17: #{tpu_custom_call.1} parent=15 // pred_check
          %p140 = pneg %p55
        $region18: #{tpu_custom_call.1} parent=15 // pred_check_branch
          %142 = sbr.rel (%p140) target = $region20
        $region19: #{tpu_custom_call.1} parent=15 // pred_region
          %s143 = sand.u32 %s45, 1
          %s144 = scalar_lea.sflag [#allocation3], %s143
          %s145 = sand.u32 %s45, 1
          %s146 = smul.addr %s145, 8
          %s147 = scalar_lea.vmem [#allocation2], %s146
          %s148 = smul.u32 %s22, 2
          %s149 = sadd.s32 %s148, %s23
          %p150 = scmp.lt.s32.totalorder %s149, 1
          %s151 = scalar_select %p150, %s149, 1
          %153 = vsyncadd %s144, 0
          %s154 = smul.addr %s151, 8
          %s155 = scalar_lea.hbm %s0, %s154
          %s157 = sshll.u32 %s155, 4
          %s158 = int_to_ptr.hbm [resolvable:$true] %s157
          %s159 = sshll.u32 %s147, 4
          %s160 = int_to_ptr.vmem [resolvable:$true] %s159
          %162 = dma.hbm_to_vmem [thread:$0]  %s158, 128, %s160, %s144
        $region20: #{tpu_custom_call.1} parent=15 // pred_fallthru
          _
        // Predicated region
        $region21: #{tpu_custom_call.1} parent=15 // pred_check
          %p163 = pneg %p89
        $region22: #{tpu_custom_call.1} parent=15 // pred_check_branch
          %165 = sbr.rel (%p163) target = $region24
        $region23: #{tpu_custom_call.1} parent=15 // pred_region
          %s166 = sand.u32 %s79, 1
          %s167 = scalar_lea.sflag [#allocation6], %s166
          %s168 = sand.u32 %s79, 1
          %s169 = smul.addr %s168, 24
          %s170 = scalar_lea.vmem [#allocation5], %s169
          %s171 = smul.u32 %s22, 2
          %s172 = sadd.s32 %s171, %s23
          %p173 = scmp.lt.s32.totalorder %s172, 1
          %s174 = scalar_select %p173, %s172, 1
          %176 = vsyncadd %s167, 0
          %s177 = smul.addr %s174, 8
          %s178 = scalar_lea.hbm %s1, %s177
          %s179 = sshll.u32 %s178, 4
          %s180 = int_to_ptr.hbm [resolvable:$true] %s179
          %s181 = sshll.u32 %s170, 4
          %s182 = int_to_ptr.vmem [resolvable:$true] %s181
          %187 = dma.hbm_to_vmem [thread:$0]  %s180, 384, %s182, %s167, 256, 128, 8
        $region24: #{tpu_custom_call.1} parent=15 // pred_fallthru
          _
      $region16: #{tpu_custom_call.1} parent=5 // pred_fallthru
        _
      %p188 = scmp.le.s32.totalorder 1, %s15
      %p189 = scmp.lt.s32.totalorder %s15, 3
      %p190 = pnand %p188, %p189
      %p191 = pneg %p190
      // Predicated region
      $region25: #{tpu_custom_call.1} parent=5 // pred_check
        _
      $region26: #{tpu_custom_call.1} parent=5 // pred_check_branch
        %193 = sbr.rel (%p190) target = $region28
      $region27: #{tpu_custom_call.1} parent=5 // pred_region
        %s194 = ssub.s32 %s15, 1
        %s195 = sand.u32 %s48, 1
        %s196 = scalar_lea.sflag [#allocation3], %s195
        %s197 = sand.u32 %s48, 1
        %s198 = smul.addr %s197, 8
        %s199 = scalar_lea.vmem [#allocation2], %s198
        // Predicated region
        $region29: #{tpu_custom_call.1} parent=27 // pred_check
          %p200 = pneg %p61
        $region30: #{tpu_custom_call.1} parent=27 // pred_check_branch
          %202 = sbr.rel (%p200) target = $region32
        $region31: #{tpu_custom_call.1} parent=27 // pred_region
          %204 = dma.done %s196, 128
        $region32: #{tpu_custom_call.1} parent=27 // pred_fallthru
          _
        %s205 = sand.u32 %s82, 1
        %s206 = scalar_lea.sflag [#allocation6], %s205
        %s207 = sand.u32 %s82, 1
        %s208 = smul.addr %s207, 24
        %s209 = scalar_lea.vmem [#allocation5], %s208
        // Predicated region
        $region33: #{tpu_custom_call.1} parent=27 // pred_check
          %p210 = pneg %p95
        $region34: #{tpu_custom_call.1} parent=27 // pred_check_branch
          %212 = sbr.rel (%p210) target = $region36
        $region35: #{tpu_custom_call.1} parent=27 // pred_region
          %214 = dma.done %s206, 384
        $region36: #{tpu_custom_call.1} parent=27 // pred_fallthru
          _
        %s215 = sand.u32 %s48, 1
        %s216 = scalar_lea.sflag [#allocation3], %s215
        %s217 = sand.u32 %s48, 1
        %s218 = smul.addr %s217, 8
        %s219 = scalar_lea.vmem [#allocation2], %s218
        %p220 = pneg %p61
        %p221 = pneg %p58
        %s222 = sand.u32 %s82, 1
        %s223 = scalar_lea.sflag [#allocation6], %s222
        %s224 = sand.u32 %s82, 1
        %s225 = smul.addr %s224, 24
        %s226 = scalar_lea.vmem [#allocation5], %s225
        %p227 = pneg %p95
        %p228 = pneg %p92
        %p229 = pneg %p121
        %p230 = pneg %p118
        %s231 = smul.u32 %s24, 2
        %s232 = sadd.s32 %s231, %s25
        %p233 = scmp.lt.s32.totalorder %s232, 1
        %s234 = scalar_select %p233, %s232, 1
        %s235 = smul.u32 %s24, 2
        %s236 = sadd.s32 %s235, %s25
        %p237 = scmp.lt.s32.totalorder %s236, 1
        %s238 = scalar_select %p237, %s236, 1
        %p239 = scmp.eq.s32.totalorder %s25, 0
        // Predicated region
        $region37: #{tpu_custom_call.1} parent=27 // pred_check
          %p240 = pneg %p239
        $region38: #{tpu_custom_call.1} parent=27 // pred_check_branch
          %242 = sbr.rel (%p240) target = $region40
        $region39: #{tpu_custom_call.1} parent=27 // pred_region
          %243 = vst [vmem:[#allocation7] sm:$0xff] 0.0
        $region40: #{tpu_custom_call.1} parent=27 // pred_fallthru
          _
        %v244 = vld [vmem:[%s199] sm:$0xff]
        %v245 = vld [vmem:[%s209] sm:$0xff]
        %s246 = scalar_lea.vmem %s209, 8 [#allocation5]
        %v247 = vld [vmem:[%s246] sm:$0xff]
        %s248 = scalar_lea.vmem %s209, 16 [#allocation5]
        %v249 = vld [vmem:[%s248] sm:$0xff]
        %v250 = vsub.f32 1.0, %v244
        %v251 = vadd.f32 %v250, 1e-10
        %v252 = vlog2.pop %v251
        %v253 = vmul.f32 %v252, 0.6931472
        %v254 = vmul.f32 %v245, %v253
        %v255 = vadd.f32 %v244, 1e-10
        %v256 = vlog2.pop %v255
        %v257 = vmul.f32 %v256, 0.6931472
        %v258 = vmul.f32 %v247, %v257
        %v259 = vadd.f32 %v254, %v258
        %v260 = vmul.f32 %v249, %v259
        %s261 = smul.u32 %s24, 2
        %s262 = sadd.s32 %s261, %s25
        %s263 = smul.u32 %s262, 8
        %v264 = vlaneseq
        %v265 = vshrl.u32 %v264, 7
        %v266 = vstv %s263
        %v267 = vadd.s32 %v266, %v265
        %vm268 = vcmp.lt.s32.totalorder %v267, 16
        %v269 = vsel %vm268, %v260, 0.0
        %v270 = vld [vmem:[#allocation7] sm:$0xff]
        %v271 = vadd.f32 %v269, 0.0
        %v272 = vadd.f32 %v270, %v271
        %273 = vst [vmem:[#allocation7] sm:$0xff] %v272
        // Predicated region
        $region41: #{tpu_custom_call.1} parent=27 // pred_check
          %p274 = pneg %p118
        $region42: #{tpu_custom_call.1} parent=27 // pred_check_branch
          %276 = sbr.rel (%p274) target = $region44
        $region43: #{tpu_custom_call.1} parent=27 // pred_region
          %278 = vsyncadd [#allocation4], 0
          %s279 = smul.addr %s24, 8
          %s280 = scalar_lea.hbm %s2, %s279
          %s282 = sshll.u32 [#allocation7], 4
          %s283 = int_to_ptr.vmem [resolvable:$true] %s282
          %s284 = sshll.u32 %s280, 4
          %s285 = int_to_ptr.hbm [resolvable:$true] %s284
          %287 = dma.vmem_to_hbm [thread:$0]  %s283, 128, %s285, [#allocation4]
        $region44: #{tpu_custom_call.1} parent=27 // pred_fallthru
          _
        // Predicated region
        $region45: #{tpu_custom_call.1} parent=27 // pred_check
          %p288 = pneg %p118
        $region46: #{tpu_custom_call.1} parent=27 // pred_check_branch
          %290 = sbr.rel (%p288) target = $region48
        $region47: #{tpu_custom_call.1} parent=27 // pred_region
          %292 = dma.done [#allocation4], 128
        $region48: #{tpu_custom_call.1} parent=27 // pred_fallthru
          _
      $region28: #{tpu_custom_call.1} parent=5 // pred_fallthru
        _
      %p293 = scmp.le.s32.totalorder 2, %s15
      // Predicated region
      $region49: #{tpu_custom_call.1} parent=5 // pred_check
        %p294 = pneg %p293
      $region50: #{tpu_custom_call.1} parent=5 // pred_check_branch
        %296 = sbr.rel (%p294) target = $region52
      $region51: #{tpu_custom_call.1} parent=5 // pred_region
        %s297 = ssub.s32 %s15, 2
      $region52: #{tpu_custom_call.1} parent=5 // pred_fallthru
        _
    $region6: #{tpu_custom_call.1} parent=1 // loop_footer
      %s19 = sadd.s32 1, %s15
    $region7: #{tpu_custom_call.1} parent=1 // loop_footer_branch
      %14 = sbr.rel target = $region3
    $region8: #{tpu_custom_call.1} parent=1 // loop_exit
      _
    %298 = vsyncpa [#allocation3], 1
    %s299 = scalar_lea.sflag [#allocation3], 1
    %300 = vsyncpa %s299, 1
    %301 = vsyncpa [#allocation6], 1
    %s302 = scalar_lea.sflag [#allocation6], 1
    %303 = vsyncpa %s302, 1
    %304 = vsyncpa [#allocation4], 1
    %s305 = scalar_lea.sflag [#allocation4], 1
    %306 = vsyncpa %s305, 1

</llo_original>
